<compile_context>
chip_gen: v6e
topology: v6e:2x2x1
jax: 0.10.0
libtpu: 0.0.40
codegen_flags: <defaults>
</compile_context>

<pallas_src>
import functools

import jax
import jax.numpy as jnp
from jax.experimental import pallas as pl
from jax.experimental.pallas import tpu as pltpu

EPS = 1e-5  # PyTorch nn.LayerNorm default

# Set to jnp.bfloat16 to feed the native bf16 MXU path on v6e/v7x (accumulation
# stays f32 via preferred_element_type). Kept f32 to match PyTorch numerics.
MATMUL_DTYPE = jnp.float32

# Explicit scoped-VMEM budget: fits v7x's 64 MiB physical with headroom, above
# the 16/32 MiB defaults on v5e/v6e.
_VMEM_LIMIT = 48 * 1024 * 1024


def _compiler_params(dimension_semantics):
    return pltpu.CompilerParams(dimension_semantics=dimension_semantics,
                                vmem_limit_bytes=_VMEM_LIMIT)


def _pick_tile(dim, target):
    """Largest clean tile <= target that divides dim (halving search);
    full dim if small or nothing divides."""
    if dim <= target:
        return dim
    t = target
    while t >= 128:
        if dim % t == 0:
            return t
        t //= 2
    return dim


def _gelu_exact(x):
    # nn.GELU() is the exact (erf) GELU.  lax.erf has no Mosaic lowering rule,
    # so erf is evaluated in-kernel with the Abramowitz & Stegun 7.1.26
    # polynomial (|err| < 1.5e-7, below f32 matmul noise).
    z = x * 0.7071067811865476
    sign = jnp.where(z < 0.0, -1.0, 1.0)
    a = jnp.abs(z)
    t = 1.0 / (1.0 + 0.3275911 * a)
    poly = t * (0.254829592 + t * (-0.284496736 + t * (1.421413741
                + t * (-1.453152027 + t * 1.061405429))))
    erf = sign * (1.0 - poly * jnp.exp(-a * a))
    return 0.5 * x * (1.0 + erf)


# --------------------------------------------------------------------------- #
# Tiled matmul kernel: y = x @ W [+ bias] [-> GELU] [+ residual]
# --------------------------------------------------------------------------- #

def _matmul_kernel(*refs, has_bias, has_residual, activation, single_k):
    x_ref, w_ref = refs[0], refs[1]
    i = 2
    bias_ref = res_ref = None
    if has_bias:
        bias_ref = refs[i]; i += 1
    if has_residual:
        res_ref = refs[i]; i += 1
    o_ref = refs[i]
    acc_ref = None if single_k else refs[i + 1]

    def epilogue(y):
        if has_bias:
            y = y + bias_ref[...].astype(jnp.float32)
        if activation == "gelu":
            y = _gelu_exact(y)
        if has_residual:
            y = y + res_ref[...].astype(jnp.float32)
        o_ref[...] = y.astype(o_ref.dtype)

    part = jnp.dot(x_ref[...].astype(MATMUL_DTYPE),
                   w_ref[...].astype(MATMUL_DTYPE),
                   preferred_element_type=jnp.float32)

    if single_k:
        epilogue(part)
    else:
        k = pl.program_id(2)

        @pl.when(k == 0)
        def _():
            acc_ref[...] = jnp.zeros_like(acc_ref)

        acc_ref[...] += part

        @pl.when(k == pl.num_programs(2) - 1)
        def _():
            epilogue(acc_ref[...])


def matmul(x, w, bias=None, residual=None, activation=None,
           tm=256, tn=256, tk=512):
    M, K = x.shape
    K2, N = w.shape
    assert K == K2
    tm, tn, tk = _pick_tile(M, tm), _pick_tile(N, tn), _pick_tile(K, tk)
    nk = K // tk
    single_k = (nk == 1)

    if single_k:
        grid = (M // tm, N // tn)
        x_spec = pl.BlockSpec((tm, K), lambda i, j: (i, 0))
        w_spec = pl.BlockSpec((K, tn), lambda i, j: (0, j))
        b_spec = pl.BlockSpec((1, tn), lambda i, j: (0, j))
        r_spec = pl.BlockSpec((tm, tn), lambda i, j: (i, j))
        o_spec = pl.BlockSpec((tm, tn), lambda i, j: (i, j))
        scratch = []
        sem = ("parallel", "parallel")
    else:
        grid = (M // tm, N // tn, nk)
        x_spec = pl.BlockSpec((tm, tk), lambda i, j, k: (i, k))
        w_spec = pl.BlockSpec((tk, tn), lambda i, j, k: (k, j))
        b_spec = pl.BlockSpec((1, tn), lambda i, j, k: (0, j))
        r_spec = pl.BlockSpec((tm, tn), lambda i, j, k: (i, j))
        o_spec = pl.BlockSpec((tm, tn), lambda i, j, k: (i, j))
        scratch = [pltpu.VMEM((tm, tn), jnp.float32)]
        sem = ("parallel", "parallel", "arbitrary")

    in_specs = [x_spec, w_spec]
    args = [x, w]
    if bias is not None:
        in_specs.append(b_spec)
        args.append(bias.reshape(1, N))
    if residual is not None:
        in_specs.append(r_spec)
        args.append(residual)

    kernel = functools.partial(_matmul_kernel,
                               has_bias=bias is not None,
                               has_residual=residual is not None,
                               activation=activation,
                               single_k=single_k)
    return pl.pallas_call(
        kernel,
        out_shape=jax.ShapeDtypeStruct((M, N), x.dtype),
        grid=grid,
        in_specs=in_specs,
        out_specs=o_spec,
        scratch_shapes=scratch,
        compiler_params=_compiler_params(sem),
        cost_estimate=pl.CostEstimate(
            flops=2 * M * N * K,
            transcendentals=M * N if activation == "gelu" else 0,
            bytes_accessed=4 * (M * K + K * N + 2 * M * N)),
    )(*args)


# --------------------------------------------------------------------------- #
# Fused LayerNorm + matmul kernel: y = LN(x) @ W [+ bias] [-> GELU]
# (K = full hidden dim; LN needs the whole row, so K is not tiled here.)
# --------------------------------------------------------------------------- #

def _ln_matmul_kernel(*refs, has_bias, activation):
    x_ref, g_ref, bln_ref, w_ref = refs[:4]
    i = 4
    bias_ref = None
    if has_bias:
        bias_ref = refs[i]; i += 1
    o_ref = refs[i]

    x = x_ref[...].astype(jnp.float32)
    mean = jnp.mean(x, axis=-1, keepdims=True)
    xc = x - mean
    var = jnp.mean(xc * xc, axis=-1, keepdims=True)
    xn = xc * jax.lax.rsqrt(var + EPS)
    xn = xn * g_ref[...].astype(jnp.float32) + bln_ref[...].astype(jnp.float32)

    y = jnp.dot(xn.astype(MATMUL_DTYPE), w_ref[...].astype(MATMUL_DTYPE),
                preferred_element_type=jnp.float32)
    if has_bias:
        y = y + bias_ref[...].astype(jnp.float32)
    if activation == "gelu":
        y = _gelu_exact(y)
    o_ref[...] = y.astype(o_ref.dtype)


def ln_matmul(x, gamma, beta, w, bias=None, activation=None, tm=256, tn=256):
    M, K = x.shape
    _, N = w.shape
    tm, tn = _pick_tile(M, tm), _pick_tile(N, tn)
    grid = (M // tm, N // tn)

    in_specs = [pl.BlockSpec((tm, K), lambda i, j: (i, 0)),
                pl.BlockSpec((1, K), lambda i, j: (0, 0)),
                pl.BlockSpec((1, K), lambda i, j: (0, 0)),
                pl.BlockSpec((K, tn), lambda i, j: (0, j))]
    args = [x, gamma.reshape(1, K), beta.reshape(1, K), w]
    if bias is not None:
        in_specs.append(pl.BlockSpec((1, tn), lambda i, j: (0, j)))
        args.append(bias.reshape(1, N))

    kernel = functools.partial(_ln_matmul_kernel,
                               has_bias=bias is not None,
                               activation=activation)
    return pl.pallas_call(
        kernel,
        out_shape=jax.ShapeDtypeStruct((M, N), x.dtype),
        grid=grid,
        in_specs=in_specs,
        out_specs=pl.BlockSpec((tm, tn), lambda i, j: (i, j)),
        compiler_params=_compiler_params(("parallel", "parallel")),
        cost_estimate=pl.CostEstimate(
            flops=2 * M * N * K + 10 * M * K,
            transcendentals=(M * N if activation == "gelu" else 0) + M,
            bytes_accessed=4 * (M * K + K * N + M * N)),
    )(*args)


# --------------------------------------------------------------------------- #
# Attention (all heads fused per batch) + output projection in one kernel.
# --------------------------------------------------------------------------- #

def _mha_outproj(q, k, v, w, b, *, num_heads, scale, add_q_residual):
    """q: (Sq,H), k/v: (Sk,H), w: (H,H), b: (1,H)  ->  (Sq,H), all f32."""
    H = q.shape[-1]
    D = H // num_heads
    heads = []
    for h in range(num_heads):
        sl = slice(h * D, (h + 1) * D)
        qh, kh, vh = q[:, sl], k[:, sl], v[:, sl]
        s = jax.lax.dot_general(qh, kh, (((1,), (1,)), ((), ())),
                                preferred_element_type=jnp.float32) * scale
        s = s - jnp.max(s, axis=-1, keepdims=True)
        p = jnp.exp(s)
        p = p * pl.reciprocal(jnp.sum(p, axis=-1, keepdims=True), approx=True)
        oh = jnp.dot(p, vh, preferred_element_type=jnp.float32)
        if add_q_residual:          # CABlock: lx = q + att @ v (per head)
            oh = oh + qh
        heads.append(oh)
    # Lane-concat once, then a single full-K out-proj matmul (dense MXU K dim).
    merged = jnp.concatenate(heads, axis=-1) if num_heads > 1 else heads[0]
    return jnp.dot(merged.astype(MATMUL_DTYPE), w.astype(MATMUL_DTYPE),
                   preferred_element_type=jnp.float32) + b


def _sa_attn_kernel(qkv_ref, w_ref, b_ref, o_ref, *, num_heads, scale):
    qkv = qkv_ref[0].astype(jnp.float32)                 # (S, 3H)
    H = qkv.shape[-1] // 3
    q, k, v = qkv[:, :H], qkv[:, H:2 * H], qkv[:, 2 * H:]
    y = _mha_outproj(q, k, v, w_ref[...].astype(jnp.float32),
                     b_ref[...].astype(jnp.float32),
                     num_heads=num_heads, scale=scale, add_q_residual=False)
    o_ref[0] = y.astype(o_ref.dtype)


def _ca_attn_kernel(q_ref, kv_ref, w_ref, b_ref, o_ref, *, num_heads, scale):
    q = q_ref[0].astype(jnp.float32)                     # (Sq, H)
    kv = kv_ref[0].astype(jnp.float32)                   # (Sk, 2H)
    H = q.shape[-1]
    k, v = kv[:, :H], kv[:, H:]
    y = _mha_outproj(q, k, v, w_ref[...].astype(jnp.float32),
                     b_ref[...].astype(jnp.float32),
                     num_heads=num_heads, scale=scale, add_q_residual=True)
    o_ref[0] = y.astype(o_ref.dtype)


# TODO(synk): for very long sequences the per-batch attention block should also
# tile the query axis; unnecessary at the sequence lengths this module targets.

def sa_attention(qkv, out_w, out_b, num_heads):
    B, S, H3 = qkv.shape
    H = H3 // 3
    D = H // num_heads
    kernel = functools.partial(_sa_attn_kernel, num_heads=num_heads,
                               scale=D ** -0.5)
    return pl.pallas_call(
        kernel,
        out_shape=jax.ShapeDtypeStruct((B, S, H), qkv.dtype),
        grid=(B,),
        in_specs=[pl.BlockSpec((1, S, H3), lambda b: (b, 0, 0)),
                  pl.BlockSpec((H, H), lambda b: (0, 0)),
                  pl.BlockSpec((1, H), lambda b: (0, 0))],
        out_specs=pl.BlockSpec((1, S, H), lambda b: (b, 0, 0)),
        compiler_params=_compiler_params(("parallel",)),
        cost_estimate=pl.CostEstimate(
            flops=B * (4 * S * S * H + 2 * S * H * H),
            transcendentals=B * num_heads * S * S,
            bytes_accessed=4 * (B * S * H3 + H * H + B * S * H)),
    )(qkv, out_w, out_b.reshape(1, H))


def ca_attention(q, kv, out_w, out_b, num_heads):
    B, Sq, H = q.shape
    Sk = kv.shape[1]
    D = H // num_heads
    kernel = functools.partial(_ca_attn_kernel, num_heads=num_heads,
                               scale=D ** -0.5)
    return pl.pallas_call(
        kernel,
        out_shape=jax.ShapeDtypeStruct((B, Sq, H), q.dtype),
        grid=(B,),
        in_specs=[pl.BlockSpec((1, Sq, H), lambda b: (b, 0, 0)),
                  pl.BlockSpec((1, Sk, 2 * H), lambda b: (b, 0, 0)),
                  pl.BlockSpec((H, H), lambda b: (0, 0)),
                  pl.BlockSpec((1, H), lambda b: (0, 0))],
        out_specs=pl.BlockSpec((1, Sq, H), lambda b: (b, 0, 0)),
        compiler_params=_compiler_params(("parallel",)),
        cost_estimate=pl.CostEstimate(
            flops=B * (4 * Sq * Sk * H + 2 * Sq * H * H),
            transcendentals=B * num_heads * Sq * Sk,
            bytes_accessed=4 * (B * Sq * H + 2 * B * Sk * H + H * H + B * Sq * H)),
    )(q, kv, out_w, out_b.reshape(1, H))


# --------------------------- module-level functions ------------------------ #

def sa_block(x, norm_g, norm_b, p, num_heads):
    """SABlock(norm1(x)): fused LN+QKV (bias-free), then fused attention+out_proj."""
    B, S, H = x.shape
    qkv = ln_matmul(x.reshape(B * S, H), norm_g, norm_b, p["qkv_w"])
    return sa_attention(qkv.reshape(B, S, 3 * H), p["out_w"], p["out_b"], num_heads)


def ca_block(lx, hx, p, num_heads):
    """CABlock: Q from lx, K/V from hx (sliced weight columns), q-residual + out_proj fused."""
    B, Sl, H = lx.shape
    Sh = hx.shape[1]
    w = p["qkv_w"]                       # columns: [Q | K | V], heads-major inside each
    lq = matmul(lx.reshape(B * Sl, H), w[:, :H]).reshape(B, Sl, H)
    hkv = matmul(hx.reshape(B * Sh, H), w[:, H:]).reshape(B, Sh, 2 * H)
    return ca_attention(lq, hkv, p["out_w"], p["out_b"], num_heads)


def mlp_block(x, norm_g, norm_b, p):
    """x + MLP(norm2(x)): LN+fc1+GELU in one kernel, fc2+bias+residual in another."""
    B, S, H = x.shape
    x2 = x.reshape(B * S, H)
    h = ln_matmul(x2, norm_g, norm_b, p["w1"], p["b1"], activation="gelu")
    out = matmul(h, p["w2"], p["b2"], residual=x2)
    return out.reshape(B, S, H)


def cross_attn_transformer_block(lx, hx, p, num_heads):
    lx1 = sa_block(lx, p["norm1_g"], p["norm1_b"], p["l_sa"], num_heads)
    hx1 = sa_block(hx, p["norm1_g"], p["norm1_b"], p["h_sa"], num_heads)
    lx2 = ca_block(lx1, hx1, p["ca"], num_heads)
    lx_out = mlp_block(lx2, p["norm2_g"], p["norm2_b"], p["mlp"])
    hx_out = mlp_block(hx1, p["norm2_g"], p["norm2_b"], p["mlp"])
    return lx_out, hx_out


def hilt_projector_forward(params, x, num_heads):
    hx, lx = x
    for blk in params["blocks"]:
        lx, hx = cross_attn_transformer_block(lx, hx, blk, num_heads)
    B, S, H = lx.shape
    t = ln_matmul(lx.reshape(B * S, H), params["norm_g"], params["norm_b"],
                  params["proj1_w"], params["proj1_b"], activation="gelu")
    out = matmul(t, params["proj2_w"], params["proj2_b"])
    return out.reshape(B, S, -1)


# ----------------------------- parameter init ------------------------------ #

def init_params(key, layer_num, hidden, mlp_dim, out_dim):
    def lin(k, din, dout, scale=0.02):
        kw, kb = jax.random.split(k)
        return (jax.random.normal(kw, (din, dout), jnp.float32) * scale,
                jax.random.normal(kb, (dout,), jnp.float32) * scale)

    def attn_params(k):
        k1, k2 = jax.random.split(k)
        qkv_w = jax.random.normal(k1, (hidden, 3 * hidden), jnp.float32) * 0.02
        out_w, out_b = lin(k2, hidden, hidden)
        return {"qkv_w": qkv_w, "out_w": out_w, "out_b": out_b}

    keys = jax.random.split(key, layer_num + 1)
    blocks = []
    for li in range(layer_num):
        bk = jax.random.split(keys[li], 5)
        w1, b1 = lin(bk[3], hidden, mlp_dim)
        w2, b2 = lin(bk[4], mlp_dim, hidden)
        blocks.append({
            "norm1_g": jnp.ones((hidden,), jnp.float32),
            "norm1_b": jnp.zeros((hidden,), jnp.float32),
            "norm2_g": jnp.ones((hidden,), jnp.float32),
            "norm2_b": jnp.zeros((hidden,), jnp.float32),
            "l_sa": attn_params(bk[0]),
            "h_sa": attn_params(bk[1]),
            "ca": attn_params(bk[2]),
            "mlp": {"w1": w1, "b1": b1, "w2": w2, "b2": b2},
        })
    kp1, kp2 = jax.random.split(keys[layer_num])
    p1w, p1b = lin(kp1, hidden, out_dim)
    p2w, p2b = lin(kp2, out_dim, out_dim)
    return {
        "blocks": blocks,
        "norm_g": jnp.ones((hidden,), jnp.float32),
        "norm_b": jnp.zeros((hidden,), jnp.float32),
        "proj1_w": p1w, "proj1_b": p1b,
        "proj2_w": p2w, "proj2_b": p2b,
    }


# ----------------------------------- main ----------------------------------- #

if __name__ == "__main__":
    # Small, module-consistent config: hidden % num_heads == 0.
    LAYER_NUM, HIDDEN, MLP_DIM, OUT_DIM, NUM_HEADS = 2, 32, 64, 64, 4
    B, S_HIGH, S_LOW = 2, 16, 8  # hx has more tokens than lx (cross attention)

    key = jax.random.PRNGKey(0)
    k_hx, k_lx, k_p, k_a, k_b, k_c = jax.random.split(key, 6)
    hx = jax.random.normal(k_hx, (B, S_HIGH, HIDDEN), jnp.float32)
    lx = jax.random.normal(k_lx, (B, S_LOW, HIDDEN), jnp.float32)
    params = init_params(k_p, LAYER_NUM, HIDDEN, MLP_DIM, OUT_DIM)

    # Exercise the multi-K-step (accumulator) matmul path, which the tiny demo
    # shapes otherwise never hit, and check it against a plain XLA reference.
    xa = jax.random.normal(k_a, (16, 256), jnp.float32)
    wa = jax.random.normal(k_b, (256, 128), jnp.float32) * 0.05
    ba = jax.random.normal(k_c, (128,), jnp.float32) * 0.05
    got = jax.block_until_ready(matmul(xa, wa, ba, tk=128))
    ref = xa @ wa + ba
    assert bool(jnp.allclose(got, ref, rtol=2e-3, atol=2e-3))

    fwd = jax.jit(functools.partial(hilt_projector_forward, num_heads=NUM_HEADS))
    out = fwd(params, (hx, lx))
    out = jax.block_until_ready(out)
    assert out.shape == (B, S_LOW, OUT_DIM), out.shape
    assert bool(jnp.all(jnp.isfinite(out)))
    print("KERNEL_OK")
</pallas_src>

<mosaic_0001>
module attributes {stable_mosaic.version = 11 : i64} {
  func.func @_matmul_kernel(%arg0: i32, %arg1: i32, %arg2: i32, %arg3: memref<16x128xf32, #tpu.memory_space<vmem>>, %arg4: memref<128x128xf32, #tpu.memory_space<vmem>>, %arg5: memref<1x128xf32, #tpu.memory_space<vmem>>, %arg6: memref<16x128xf32, #tpu.memory_space<vmem>>, %arg7: memref<16x128xf32, #tpu.memory_space<vmem>>) attributes {dimension_semantics = [#tpu.dimension_semantics<parallel>, #tpu.dimension_semantics<parallel>, #tpu.dimension_semantics<arbitrary>], iteration_bounds = array<i64: 1, 1, 2>, scalar_prefetch = 0 : i64, scratch_operands = 1 : i64, tpu.core_type = #tpu.core_type<tc>, window_params = [{transform_indices = @transform_0, window_bounds = array<i64: 16, 128>}, {transform_indices = @transform_1, window_bounds = array<i64: 128, 128>}, {transform_indices = @transform_2, window_bounds = array<i64: 1, 128>}, {transform_indices = @transform_3, window_bounds = array<i64: 16, 128>}]} {
    %c0 = arith.constant 0 : index
    %c0_0 = arith.constant 0 : index
    %0 = vector.load %arg3[%c0, %c0_0] : memref<16x128xf32, #tpu.memory_space<vmem>>, vector<16x128xf32>
    %c0_1 = arith.constant 0 : index
    %c0_2 = arith.constant 0 : index
    %1 = vector.load %arg4[%c0_1, %c0_2] : memref<128x128xf32, #tpu.memory_space<vmem>>, vector<128x128xf32>
    %cst = arith.constant dense<0.000000e+00> : vector<16x128xf32>
    %2 = tpu.matmul %0, %1, %cst {dimension_numbers = #tpu.dot_dimension_numbers<[1], [0], [0], [1], [0, 0, 1, 1], [], []>} : vector<16x128xf32>, vector<128x128xf32>, vector<16x128xf32> -> vector<16x128xf32>
    %c0_i32 = arith.constant 0 : i32
    %3 = arith.cmpi eq, %arg2, %c0_i32 : i32
    %4 = arith.extui %3 : i1 to i32
    %c0_i32_3 = arith.constant 0 : i32
    %5 = arith.cmpi ne, %4, %c0_i32_3 : i32
    scf.if %5 {
      %cst_9 = arith.constant 0.000000e+00 : f32
      %12 = vector.broadcast %cst_9 : f32 to vector<16x128xf32>
      %c0_10 = arith.constant 0 : index
      %c0_11 = arith.constant 0 : index
      %13 = vector.load %arg7[%c0_10, %c0_11] : memref<16x128xf32, #tpu.memory_space<vmem>>, vector<16x128xf32>
      tpu.vector_store %arg7[%c0_10, %c0_11], %12 {strides = array<i32>} : memref<16x128xf32, #tpu.memory_space<vmem>>, vector<16x128xf32>,
    } else {
    }
    %c0_4 = arith.constant 0 : index
    %c0_5 = arith.constant 0 : index
    %6 = vector.load %arg7[%c0_4, %c0_5] : memref<16x128xf32, #tpu.memory_space<vmem>>, vector<16x128xf32>
    %7 = arith.addf %6, %2 : vector<16x128xf32>
    %c0_6 = arith.constant 0 : index
    %c0_7 = arith.constant 0 : index
    %8 = vector.load %arg7[%c0_6, %c0_7] : memref<16x128xf32, #tpu.memory_space<vmem>>, vector<16x128xf32>
    tpu.vector_store %arg7[%c0_6, %c0_7], %7 {strides = array<i32>} : memref<16x128xf32, #tpu.memory_space<vmem>>, vector<16x128xf32>,
    %c1_i32 = arith.constant 1 : i32
    %9 = arith.cmpi eq, %arg2, %c1_i32 : i32
    %10 = arith.extui %9 : i1 to i32
    %c0_i32_8 = arith.constant 0 : i32
    %11 = arith.cmpi ne, %10, %c0_i32_8 : i32
    scf.if %11 {
      %c0_9 = arith.constant 0 : index
      %c0_10 = arith.constant 0 : index
      %12 = vector.load %arg7[%c0_9, %c0_10] : memref<16x128xf32, #tpu.memory_space<vmem>>, vector<16x128xf32>
      %c0_11 = arith.constant 0 : index
      %c0_12 = arith.constant 0 : index
      %13 = vector.load %arg5[%c0_11, %c0_12] : memref<1x128xf32, #tpu.memory_space<vmem>>, vector<1x128xf32>
      %14 = vector.broadcast %13 : vector<1x128xf32> to vector<16x128xf32>
      %15 = arith.addf %12, %14 : vector<16x128xf32>
      %c0_13 = arith.constant 0 : index
      %c0_14 = arith.constant 0 : index
      %16 = vector.load %arg6[%c0_13, %c0_14] : memref<16x128xf32, #tpu.memory_space<vmem>>, vector<16x128xf32>
      tpu.vector_store %arg6[%c0_13, %c0_14], %15 {strides = array<i32>} : memref<16x128xf32, #tpu.memory_space<vmem>>, vector<16x128xf32>,
    } else {
    }
    return
  }
  func.func @transform_0(%arg0: i32, %arg1: i32, %arg2: i32) -> (i32, i32) {
    %c0_i32 = arith.constant 0 : i32
    return %arg0, %arg2 : i32, i32
  }
  func.func @transform_1(%arg0: i32, %arg1: i32, %arg2: i32) -> (i32, i32) {
    %c0_i32 = arith.constant 0 : i32
    return %arg2, %arg1 : i32, i32
  }
  func.func @transform_2(%arg0: i32, %arg1: i32, %arg2: i32) -> (i32, i32) {
    %c0_i32 = arith.constant 0 : i32
    %c0_i32_0 = arith.constant 0 : i32
    return %c0_i32, %arg1 : i32, i32
  }
  func.func @transform_3(%arg0: i32, %arg1: i32, %arg2: i32) -> (i32, i32) {
    %c0_i32 = arith.constant 0 : i32
    return %arg0, %arg1 : i32, i32
  }
}

</mosaic_0001>

<llo_original>
// kernel: tpu_custom_call.1
$region0: #{tpu_custom_call.1}
  #allocation0 [shape = 'u32[]', space=smem, size = 0x4, offset = 0x4, fixed_abs, tag = 'smem constant byte address 0x4 - core index']
  #allocation1 [shape = 'u32[144,128]{1,0:T(1,128)}', space=vmem, size = 0x12000, scoped, tag = 'internal scratch']
  #allocation2 [shape = 'f32[16,128]{1,0:T(8,128)}', space=vmem, size = 0x2000, scoped, tag = 'scratch operand']
  %s0 = inlined_call_operand.hbm [shape: f32[16,256], index: 0, kind: input, shape index: {}]
  %s1 = inlined_call_operand.hbm [shape: f32[256,128], index: 1, kind: input, shape index: {}]
  %s2 = inlined_call_operand.vmem [shape: f32[1,128], index: 2, kind: input, shape index: {}]
  %s3 = inlined_call_operand.hbm [shape: f32[16,128], index: 3, kind: output, shape index: {}]
  %s4 = sld [smem:[#allocation0]]
  $region61: #{tpu_custom_call.1} parent=0
    _
  %s6 = ssub.s32 1, %s4
  %s7 = scalar_select 0, %s6, %s4
  $region1: #{tpu_custom_call.1} parent=0
    #allocation3 [shape = 'u8[16384]{0}', space=vmem, size = 0x4000, scoped, tag = 'input window, operand 0']
    #allocation4 [shape = 's32[2]{0}', space=sflag, size = 0x8, scoped, tag = 'scoped memory for tpu_custom_call.1']
    #allocation5 [shape = 's32[2]{0}', space=sflag, size = 0x8, scoped, tag = 'scoped memory for tpu_custom_call.1']
    #allocation6 [shape = 'u8[131072]{0}', space=vmem, size = 0x20000, scoped, tag = 'input window, operand 1']
    #allocation7 [shape = 's32[2]{0}', space=sflag, size = 0x8, scoped, tag = 'scoped memory for tpu_custom_call.1']
    #allocation8 [shape = 'u8[8192]{0}', space=vmem, size = 0x2000, scoped, tag = 'output window, operand 0, single buffered']
    %8 = vsyncpa [#allocation4], 0
    %s9 = scalar_lea.sflag [#allocation4], 1
    %10 = vsyncpa %s9, 0
    %11 = vsyncpa [#allocation7], 0
    %s12 = scalar_lea.sflag [#allocation7], 1
    %13 = vsyncpa %s12, 0
    %14 = vsyncpa [#allocation5], 0
    loop: start=0, step=1, limit=4
    $region2: #{tpu_custom_call.1} parent=1 // loop_pre_header
      _
    $region3: #{tpu_custom_call.1} parent=1 // loop_header
      %s16 = sphi 0, %s20
      %p17 = scmp.ge.s32.totalorder %s16, 4
      %s23 = sphi 0, %s42
      %s24 = sphi 0, %s38
      %s25 = sphi 0, %s34
      %s26 = sphi 0, %s23
      %s27 = sphi 0, %s24
      %s28 = sphi 0, %s25
      %s29 = sphi 0, %s26
      %s30 = sphi 0, %s27
      %s31 = sphi 0, %s28
      %s47 = sphi 0, %s49
      %s50 = sphi 0, %s47
      %s51 = sphi 0, %s50
      %s67 = sphi 0, %s51
      %s75 = sphi 0, %s77
      %s78 = sphi 0, %s75
      %s79 = sphi 0, %s78
      %s95 = sphi 0, %s79
      %s101 = sphi 0, %s103
      %s104 = sphi 0, %s101
      %s105 = sphi 0, %s104
      %s121 = sphi 0, %s105
      %s129 = sphi 0, %s131
      %s132 = sphi 0, %s129
      %s133 = sphi 0, %s132
      %s149 = sphi 0, %s133
    $region4: #{tpu_custom_call.1} parent=1 // loop_header_branch
      %19 = sbr.rel (%p17) target = $region8
    $region5: #{tpu_custom_call.1} parent=1 // loop_body
      %s21 = ssub.s32 %s16, 1
      %s22 = ssub.s32 %s16, 2
      %s32 = sadd.s32 1, %s25
      %p33 = scmp.ge.s32.totalorder %s32, 2
      %s34 = scalar_select %p33, 0, %s32
      %s35 = sadd.s32 1, %s24
      %s36 = scalar_select %p33, %s35, %s24
      %p37 = scmp.ge.s32.totalorder %s36, 1
      %s38 = scalar_select %p37, 0, %s36
      %s39 = sadd.s32 1, %s23
      %s40 = scalar_select %p37, %s39, %s23
      %p41 = scmp.ge.s32.totalorder %s40, 1
      %s42 = scalar_select %p41, 0, %s40
      %s43 = ssub.s32 %s23, %s42
      %s44 = ssub.s32 %s25, %s34
      %s45 = sor.u32 %s43, %s44
      %p46 = scmp.eq.s32.totalorder %s45, 0
      %s48 = sadd.s32 %s47, 1
      %s49 = scalar_select %p46, %s47, %s48
      %p52 = pneg %p46
      %p53 = scmp.eq.s32.totalorder %s16, 1
      %p54 = por %p52, %p53
      %p55 = scmp.ne.s32.totalorder %s47, %s50
      %p56 = scmp.eq.s32.totalorder %s16, 0
      %p57 = por %p55, %p56
      %p58 = scmp.ne.s32.totalorder %s47, %s50
      %p59 = scmp.eq.s32.totalorder %s21, 1
      %p60 = por %p58, %p59
      %p61 = scmp.ne.s32.totalorder %s50, %s51
      %p62 = scmp.eq.s32.totalorder %s21, 0
      %p63 = por %p61, %p62
      %p64 = scmp.ne.s32.totalorder %s50, %s51
      %p65 = scmp.eq.s32.totalorder %s22, 1
      %p66 = por %p64, %p65
      %p68 = scmp.ne.s32.totalorder %s51, %s67
      %p69 = scmp.eq.s32.totalorder %s22, 0
      %p70 = por %p68, %p69
      %s71 = ssub.s32 %s25, %s34
      %s72 = ssub.s32 %s24, %s38
      %s73 = sor.u32 %s71, %s72
      %p74 = scmp.eq.s32.totalorder %s73, 0
      %s76 = sadd.s32 %s75, 1
      %s77 = scalar_select %p74, %s75, %s76
      %p80 = pneg %p74
      %p81 = scmp.eq.s32.totalorder %s16, 1
      %p82 = por %p80, %p81
      %p83 = scmp.ne.s32.totalorder %s75, %s78
      %p84 = scmp.eq.s32.totalorder %s16, 0
      %p85 = por %p83, %p84
      %p86 = scmp.ne.s32.totalorder %s75, %s78
      %p87 = scmp.eq.s32.totalorder %s21, 1
      %p88 = por %p86, %p87
      %p89 = scmp.ne.s32.totalorder %s78, %s79
      %p90 = scmp.eq.s32.totalorder %s21, 0
      %p91 = por %p89, %p90
      %p92 = scmp.ne.s32.totalorder %s78, %s79
      %p93 = scmp.eq.s32.totalorder %s22, 1
      %p94 = por %p92, %p93
      %p96 = scmp.ne.s32.totalorder %s79, %s95
      %p97 = scmp.eq.s32.totalorder %s22, 0
      %p98 = por %p96, %p97
      %s99 = ssub.s32 %s24, %s38
      %p100 = scmp.eq.s32.totalorder %s99, 0
      %s102 = sadd.s32 %s101, 1
      %s103 = scalar_select %p100, %s101, %s102
      %p106 = pneg %p100
      %p107 = scmp.eq.s32.totalorder %s16, 1
      %p108 = por %p106, %p107
      %p109 = scmp.ne.s32.totalorder %s101, %s104
      %p110 = scmp.eq.s32.totalorder %s16, 0
      %p111 = por %p109, %p110
      %p112 = scmp.ne.s32.totalorder %s101, %s104
      %p113 = scmp.eq.s32.totalorder %s21, 1
      %p114 = por %p112, %p113
      %p115 = scmp.ne.s32.totalorder %s104, %s105
      %p116 = scmp.eq.s32.totalorder %s21, 0
      %p117 = por %p115, %p116
      %p118 = scmp.ne.s32.totalorder %s104, %s105
      %p119 = scmp.eq.s32.totalorder %s22, 1
      %p120 = por %p118, %p119
      %p122 = scmp.ne.s32.totalorder %s105, %s121
      %p123 = scmp.eq.s32.totalorder %s22, 0
      %p124 = por %p122, %p123
      %s125 = ssub.s32 %s23, %s42
      %s126 = ssub.s32 %s24, %s38
      %s127 = sor.u32 %s125, %s126
      %p128 = scmp.eq.s32.totalorder %s127, 0
      %s130 = sadd.s32 %s129, 1
      %s131 = scalar_select %p128, %s129, %s130
      %p134 = pneg %p128
      %p135 = scmp.eq.s32.totalorder %s16, 1
      %p136 = por %p134, %p135
      %p137 = scmp.ne.s32.totalorder %s129, %s132
      %p138 = scmp.eq.s32.totalorder %s16, 0
      %p139 = por %p137, %p138
      %p140 = scmp.ne.s32.totalorder %s129, %s132
      %p141 = scmp.eq.s32.totalorder %s21, 1
      %p142 = por %p140, %p141
      %p143 = scmp.ne.s32.totalorder %s132, %s133
      %p144 = scmp.eq.s32.totalorder %s21, 0
      %p145 = por %p143, %p144
      %p146 = scmp.ne.s32.totalorder %s132, %s133
      %p147 = scmp.eq.s32.totalorder %s22, 1
      %p148 = por %p146, %p147
      %p150 = scmp.ne.s32.totalorder %s133, %s149
      %p151 = scmp.eq.s32.totalorder %s22, 0
      %p152 = por %p150, %p151
      %p153 = scmp.le.s32.totalorder 1, %s16
      %p154 = scmp.lt.s32.totalorder %s16, 3
      %p155 = pnand %p153, %p154
      %p156 = pneg %p155
      // Predicated region
      $region9: #{tpu_custom_call.1} parent=5 // pred_check
        _
      $region10: #{tpu_custom_call.1} parent=5 // pred_check_branch
        %158 = sbr.rel (%p155) target = $region12
      $region11: #{tpu_custom_call.1} parent=5 // pred_region
        %s159 = ssub.s32 %s16, 1
        // Predicated region
        $region13: #{tpu_custom_call.1} parent=11 // pred_check
          %p160 = pneg %p117
        $region14: #{tpu_custom_call.1} parent=11 // pred_check_branch
          %162 = sbr.rel (%p160) target = $region16
        $region15: #{tpu_custom_call.1} parent=11 // pred_region
          %p163 = scmp.lt.s32.totalorder %s27, 0
          %s164 = scalar_select %p163, %s27, 0
          %s165 = scalar_lea.vmem %s2, %s164
        $region16: #{tpu_custom_call.1} parent=11 // pred_fallthru
          _
      $region12: #{tpu_custom_call.1} parent=5 // pred_fallthru
        _
      %p166 = scmp.lt.s32.totalorder %s16, 2
      // Predicated region
      $region17: #{tpu_custom_call.1} parent=5 // pred_check
        %p167 = pneg %p166
      $region18: #{tpu_custom_call.1} parent=5 // pred_check_branch
        %169 = sbr.rel (%p167) target = $region20
      $region19: #{tpu_custom_call.1} parent=5 // pred_region
        // Predicated region
        $region21: #{tpu_custom_call.1} parent=19 // pred_check
          %p170 = pneg %p57
        $region22: #{tpu_custom_call.1} parent=19 // pred_check_branch
          %172 = sbr.rel (%p170) target = $region24
        $region23: #{tpu_custom_call.1} parent=19 // pred_region
          %s173 = sand.u32 %s47, 1
          %s174 = scalar_lea.sflag [#allocation4], %s173
          %s175 = sand.u32 %s47, 1
          %s176 = smul.addr %s175, 16
          %s177 = scalar_lea.vmem [#allocation3], %s176
          %s178 = smul.u32 2, %s23
          %s180 = ssub.s32 256, 256
          %181 = vsyncadd %s174, %s180
          %s182 = smul.addr %s178, 2
          %s183 = sadd.s32 %s25, %s182
          %s184 = smul.addr %s183, 128
          %s185 = scalar_lea.hbm %s0, %s184
          %s186 = sshll.u32 %s177, 4
          %s187 = int_to_ptr.vmem [resolvable:$true] %s186
          %192 = dma.hbm_to_vmem [thread:$0]  %s185, 256, %s187, %s174, 256, 128, 8
        $region24: #{tpu_custom_call.1} parent=19 // pred_fallthru
          _
        // Predicated region
        $region25: #{tpu_custom_call.1} parent=19 // pred_check
          %p193 = pneg %p85
        $region26: #{tpu_custom_call.1} parent=19 // pred_check_branch
          %195 = sbr.rel (%p193) target = $region28
        $region27: #{tpu_custom_call.1} parent=19 // pred_region
          %s196 = sand.u32 %s75, 1
          %s197 = scalar_lea.sflag [#allocation7], %s196
          %s198 = sand.u32 %s75, 1
          %s199 = smul.addr %s198, 128
          %s200 = scalar_lea.vmem [#allocation6], %s199
          %s201 = smul.u32 16, %s25
          %s203 = ssub.s32 2048, 2048
          %204 = vsyncadd %s197, %s203
          %s205 = sadd.s32 %s24, %s201
          %s206 = smul.addr %s205, 128
          %s207 = scalar_lea.hbm %s1, %s206
          %s208 = sshll.u32 %s200, 4
          %s209 = int_to_ptr.vmem [resolvable:$true] %s208
          %214 = dma.hbm_to_vmem [thread:$0]  %s207, 2048, %s209, %s197, 128, 128, 8
        $region28: #{tpu_custom_call.1} parent=19 // pred_fallthru
          _
      $region20: #{tpu_custom_call.1} parent=5 // pred_fallthru
        _
      %p215 = scmp.le.s32.totalorder 1, %s16
      %p216 = scmp.lt.s32.totalorder %s16, 3
      %p217 = pnand %p215, %p216
      %p218 = pneg %p217
      // Predicated region
      $region29: #{tpu_custom_call.1} parent=5 // pred_check
        _
      $region30: #{tpu_custom_call.1} parent=5 // pred_check_branch
        %220 = sbr.rel (%p217) target = $region32
      $region31: #{tpu_custom_call.1} parent=5 // pred_region
        %s221 = ssub.s32 %s16, 1
        %s222 = sand.u32 %s50, 1
        %s223 = scalar_lea.sflag [#allocation4], %s222
        %s224 = sand.u32 %s50, 1
        %s225 = smul.addr %s224, 16
        %s226 = scalar_lea.vmem [#allocation3], %s225
        // Predicated region
        $region33: #{tpu_custom_call.1} parent=31 // pred_check
          %p227 = pneg %p63
        $region34: #{tpu_custom_call.1} parent=31 // pred_check_branch
          %229 = sbr.rel (%p227) target = $region36
        $region35: #{tpu_custom_call.1} parent=31 // pred_region
          %230 = dma.done %s223, 256
        $region36: #{tpu_custom_call.1} parent=31 // pred_fallthru
          _
        %s231 = sand.u32 %s78, 1
        %s232 = scalar_lea.sflag [#allocation7], %s231
        %s233 = sand.u32 %s78, 1
        %s234 = smul.addr %s233, 128
        %s235 = scalar_lea.vmem [#allocation6], %s234
        // Predicated region
        $region37: #{tpu_custom_call.1} parent=31 // pred_check
          %p236 = pneg %p91
        $region38: #{tpu_custom_call.1} parent=31 // pred_check_branch
          %238 = sbr.rel (%p236) target = $region40
        $region39: #{tpu_custom_call.1} parent=31 // pred_region
          %239 = dma.done %s232, 2048
        $region40: #{tpu_custom_call.1} parent=31 // pred_fallthru
          _
        %s240 = sand.u32 %s50, 1
        %s241 = scalar_lea.sflag [#allocation4], %s240
        %s242 = sand.u32 %s50, 1
        %s243 = smul.addr %s242, 16
        %s244 = scalar_lea.vmem [#allocation3], %s243
        %p245 = pneg %p63
        %p246 = pneg %p60
        %s247 = sand.u32 %s78, 1
        %s248 = scalar_lea.sflag [#allocation7], %s247
        %s249 = sand.u32 %s78, 1
        %s250 = smul.addr %s249, 128
        %s251 = scalar_lea.vmem [#allocation6], %s250
        %p252 = pneg %p91
        %p253 = pneg %p88
        %p254 = scmp.lt.s32.totalorder %s27, 0
        %s255 = scalar_select %p254, %s27, 0
        %s256 = scalar_lea.vmem %s2, %s255
        %p257 = pneg %p117
        %p258 = pneg %p114
        %p259 = pneg %p145
        %p260 = pneg %p142
        %s261 = smul.u32 2, %s26
        %s262 = smul.u32 16, %s28
        %p263 = scmp.lt.s32.totalorder %s27, 0
        %s264 = scalar_select %p263, %s27, 0
        %s265 = scalar_lea.vmem %s2, %s264
        %s266 = smul.u32 2, %s26
        %v267 = vld [vmem:[%s226] sm:$0xff]
        %v268 = vld [vmem:[%s226 + $0x8] sm:$0xff]
        %v269 = vld [vmem:[%s235] sm:$0xff]
        %v270 = vld [vmem:[%s235 + $0x8] sm:$0xff]
        %v271 = vld [vmem:[%s235 + $0x10] sm:$0xff]
        %v272 = vld [vmem:[%s235 + $0x18] sm:$0xff]
        %v273 = vld [vmem:[%s235 + $0x20] sm:$0xff]
        %v274 = vld [vmem:[%s235 + $0x28] sm:$0xff]
        %v275 = vld [vmem:[%s235 + $0x30] sm:$0xff]
        %v276 = vld [vmem:[%s235 + $0x38] sm:$0xff]
        %v277 = vld [vmem:[%s235 + $0x40] sm:$0xff]
        %v278 = vld [vmem:[%s235 + $0x48] sm:$0xff]
        %v279 = vld [vmem:[%s235 + $0x50] sm:$0xff]
        %v280 = vld [vmem:[%s235 + $0x58] sm:$0xff]
        %v281 = vld [vmem:[%s235 + $0x60] sm:$0xff]
        %v282 = vld [vmem:[%s235 + $0x68] sm:$0xff]
        %v283 = vld [vmem:[%s235 + $0x70] sm:$0xff]
        %v284 = vld [vmem:[%s235 + $0x78] sm:$0xff]
        %285 = vmatprep.subr.mxu0 0.0
        %286 = vmatpush1.msra.mxu0 %v284
        %287 = vmatprep.subr.mxu0 0.0
        %288 = vmatpush1.msra.mxu0 %v283
        %289 = vmatprep.subr.mxu0 0.0
        %290 = vmatpush1.msra.mxu0 %v282
        %291 = vmatprep.subr.mxu0 0.0
        %292 = vmatpush1.msra.mxu0 %v281
        %293 = vmatprep.subr.mxu0 0.0
        %294 = vmatpush1.msra.mxu0 %v280
        %295 = vmatprep.subr.mxu0 0.0
        %296 = vmatpush1.msra.mxu0 %v279
        %297 = vmatprep.subr.mxu0 0.0
        %298 = vmatpush1.msra.mxu0 %v278
        %299 = vmatprep.subr.mxu0 0.0
        %300 = vmatpush1.msra.mxu0 %v277
        %301 = vmatprep.subr.mxu0 0.0
        %302 = vmatpush1.msra.mxu0 %v276
        %303 = vmatprep.subr.mxu0 0.0
        %304 = vmatpush1.msra.mxu0 %v275
        %305 = vmatprep.subr.mxu0 0.0
        %306 = vmatpush1.msra.mxu0 %v274
        %307 = vmatprep.subr.mxu0 0.0
        %308 = vmatpush1.msra.mxu0 %v273
        %309 = vmatprep.subr.mxu0 0.0
        %310 = vmatpush1.msra.mxu0 %v272
        %311 = vmatprep.subr.mxu0 0.0
        %312 = vmatpush1.msra.mxu0 %v271
        %313 = vmatprep.subr.mxu0 0.0
        %314 = vmatpush1.msra.mxu0 %v270
        %315 = vmatprep.subr.mxu0 0.0
        %316 = vmatpush1.msra.mxu0 %v269
        %317 = vmatprep.subr.mxu0 0.0
        %318 = vmatpush2.msra.mxu0 0.0
        %319 = vmatprep.subr.mxu0 0.0
        %320 = vmatpush2.msra.mxu0 0.0
        %321 = vmatprep.subr.mxu0 0.0
        %322 = vmatpush2.msra.mxu0 0.0
        %323 = vmatprep.subr.mxu0 0.0
        %324 = vmatpush2.msra.mxu0 0.0
        %325 = vmatprep.subr.mxu0 0.0
        %326 = vmatpush2.msra.mxu0 0.0
        %327 = vmatprep.subr.mxu0 0.0
        %328 = vmatpush2.msra.mxu0 0.0
        %329 = vmatprep.subr.mxu0 0.0
        %330 = vmatpush2.msra.mxu0 0.0
        %331 = vmatprep.subr.mxu0 0.0
        %332 = vmatpush2.msra.mxu0 0.0
        %333 = vmatprep.subr.mxu0 0.0
        %334 = vmatpush2.msra.mxu0 0.0
        %335 = vmatprep.subr.mxu0 0.0
        %336 = vmatpush2.msra.mxu0 0.0
        %337 = vmatprep.subr.mxu0 0.0
        %338 = vmatpush2.msra.mxu0 0.0
        %339 = vmatprep.subr.mxu0 0.0
        %340 = vmatpush2.msra.mxu0 0.0
        %341 = vmatprep.subr.mxu0 0.0
        %342 = vmatpush2.msra.mxu0 0.0
        %343 = vmatprep.subr.mxu0 0.0
        %344 = vmatpush2.msra.mxu0 0.0
        %345 = vmatprep.subr.mxu0 0.0
        %346 = vmatpush2.msra.mxu0 0.0
        %347 = vmatprep.subr.mxu0 0.0
        %348 = vmatpush2.msra.mxu0 0.0
        %349 = vmatprep.mubr.f32.mxu0 0.0
        %350 = vmatmul.mubr.f32.gmra.mxu0 %v267
        %v351 = vpop.f32.mrf.mxu0
        %v352 = vadd.f32 0.0, %v351
        %v353 = vpop.f32.mrf.mxu0
        %354 = vmatprep.mubr.f32.mxu0 0.0
        %355 = vmatmul.mubr.f32.gmra.mxu0 %v268
        %v356 = vpop.f32.mrf.mxu0
        %v357 = vadd.f32 0.0, %v356
        %v358 = vpop.f32.mrf.mxu0
        %359 = vdwg.mxu0
        %p360 = scmp.eq.s32.totalorder %s28, 0
        // Predicated region
        $region41: #{tpu_custom_call.1} parent=31 // pred_check
          %p361 = pneg %p360
        $region42: #{tpu_custom_call.1} parent=31 // pred_check_branch
          %363 = sbr.rel (%p361) target = $region44
        $region43: #{tpu_custom_call.1} parent=31 // pred_region
          %364 = vst [vmem:[#allocation2] sm:$0xff] 0.0
          %365 = vst [vmem:[#allocation2 + $0x8] sm:$0xff] 0.0
        $region44: #{tpu_custom_call.1} parent=31 // pred_fallthru
          _
        %v366 = vld [vmem:[#allocation2] sm:$0xff]
        %v367 = vld [vmem:[#allocation2 + $0x8] sm:$0xff]
        %v368 = vadd.f32 %v366, %v352
        %v369 = vadd.f32 %v367, %v357
        %370 = vst [vmem:[#allocation2] sm:$0xff] %v368
        %371 = vst [vmem:[#allocation2 + $0x8] sm:$0xff] %v369
        %p372 = scmp.eq.s32.totalorder %s28, 1
        // Predicated region
        $region45: #{tpu_custom_call.1} parent=31 // pred_check
          %p373 = pneg %p372
        $region46: #{tpu_custom_call.1} parent=31 // pred_check_branch
          %375 = sbr.rel (%p373) target = $region48
        $region47: #{tpu_custom_call.1} parent=31 // pred_region
          %v376 = vld [vmem:[#allocation2] sm:$0xff]
          %v377 = vld [vmem:[#allocation2 + $0x8] sm:$0xff]
          %v378 = vld [vmem:[%s265] sm:$0x1]
          %v380 = vlaneseq
          %v381 = vshrl.u32 %v380, 7
          %v382 = vsub.s32 0, %v381
          %v383 = vrot.slane %v378, %v382
          %v385 = vadd.f32 %v376, %v383
          %v386 = vadd.f32 %v377, %v383
          %387 = vst [vmem:[#allocation8] sm:$0xff] %v385
          %388 = vst [vmem:[#allocation8 + $0x8] sm:$0xff] %v386
        $region48: #{tpu_custom_call.1} parent=31 // pred_fallthru
          _
        // Predicated region
        $region49: #{tpu_custom_call.1} parent=31 // pred_check
          %p389 = pneg %p142
        $region50: #{tpu_custom_call.1} parent=31 // pred_check_branch
          %391 = sbr.rel (%p389) target = $region52
        $region51: #{tpu_custom_call.1} parent=31 // pred_region
          %s392 = smul.u32 2, %s26
          %s394 = ssub.s32 256, 256
          %395 = vsyncadd [#allocation5], %s394
          %s396 = sadd.s32 %s27, %s392
          %s397 = smul.addr %s396, 128
          %s398 = scalar_lea.hbm %s3, %s397
          %s399 = sshll.u32 [#allocation8], 4
          %s400 = int_to_ptr.vmem [resolvable:$true] %s399
          %405 = dma.vmem_to_hbm [thread:$0]  %s400, 256, %s398, [#allocation5], 128, 128, 8
        $region52: #{tpu_custom_call.1} parent=31 // pred_fallthru
          _
        // Predicated region
        $region53: #{tpu_custom_call.1} parent=31 // pred_check
          %p406 = pneg %p142
        $region54: #{tpu_custom_call.1} parent=31 // pred_check_branch
          %408 = sbr.rel (%p406) target = $region56
        $region55: #{tpu_custom_call.1} parent=31 // pred_region
          %409 = dma.done [#allocation5], 256
        $region56: #{tpu_custom_call.1} parent=31 // pred_fallthru
          _
      $region32: #{tpu_custom_call.1} parent=5 // pred_fallthru
        _
      %p410 = scmp.le.s32.totalorder 2, %s16
      // Predicated region
      $region57: #{tpu_custom_call.1} parent=5 // pred_check
        %p411 = pneg %p410
      $region58: #{tpu_custom_call.1} parent=5 // pred_check_branch
        %413 = sbr.rel (%p411) target = $region60
      $region59: #{tpu_custom_call.1} parent=5 // pred_region
        %s414 = ssub.s32 %s16, 2
      $region60: #{tpu_custom_call.1} parent=5 // pred_fallthru
        _
    $region6: #{tpu_custom_call.1} parent=1 // loop_footer
      %s20 = sadd.s32 1, %s16
    $region7: #{tpu_custom_call.1} parent=1 // loop_footer_branch
      %15 = sbr.rel target = $region3
    $region8: #{tpu_custom_call.1} parent=1 // loop_exit
      _
    %415 = vsyncpa [#allocation4], 1
    %s416 = scalar_lea.sflag [#allocation4], 1
    %417 = vsyncpa %s416, 1
    %418 = vsyncpa [#allocation7], 1
    %s419 = scalar_lea.sflag [#allocation7], 1
    %420 = vsyncpa %s419, 1
    %421 = vsyncpa [#allocation5], 1
    %s422 = scalar_lea.sflag [#allocation5], 1
    %423 = vsyncpa %s422, 1

</llo_original>
